<compile_context>
chip_gen: v7x
topology: tpu7x:2x2x1
jax: 0.10.0
libtpu: 0.0.40
codegen_flags: <defaults>
</compile_context>

<pallas_src>
import functools

import jax
import jax.numpy as jnp
from jax import lax
from jax.experimental import pallas as pl
from jax.experimental.pallas import tpu as pltpu


C = 128          # channel count fixed by the module (Conv2d(128, 128, 3, padding=1))
N_LAYERS = 18    # 9 blocks x 2 (conv + BN + ReLU) layers
BN_EPS = 1e-5


# ---------------------------------------------------------------------------
# pltpu.roll sign calibration (tiny probe kernel, run once before tracing the
# main kernel).  Removes any ambiguity in the rotate direction convention.
# ---------------------------------------------------------------------------
def _roll_probe_kernel(x_ref, o_ref):
    o_ref[...] = pltpu.roll(x_ref[...], shift=1, axis=1)


def _calibrate_roll_matches_jnp():
    x = jnp.arange(8 * 128, dtype=jnp.float32).reshape(8, 128)
    out = pl.pallas_call(
        _roll_probe_kernel,
        out_shape=jax.ShapeDtypeStruct((8, 128), jnp.float32),
    )(x)
    if bool(jnp.array_equal(out, jnp.roll(x, 1, axis=1))):
        return True          # pltpu.roll(x, s)[..., i] == x[..., i - s]
    if bool(jnp.array_equal(out, jnp.roll(x, -1, axis=1))):
        return False         # pltpu.roll(x, s)[..., i] == x[..., i + s]
    raise RuntimeError("pltpu.roll produced an unexpected rotation")


def _roll_plus(x, off, matches_jnp):
    """Return y with y[..., i] = x[..., (i + off) % n]  (lane rotation)."""
    n = x.shape[-1]
    s = (-off) % n if matches_jnp else off % n
    if s == 0:
        return x
    return pltpu.roll(x, shift=s, axis=x.ndim - 1)


# ---------------------------------------------------------------------------
# Fused kernel: all 18 Conv3x3+BN+ReLU layers in one invocation.
# ---------------------------------------------------------------------------
def mid_fused_kernel(x_ref, w_hbm, b_ref, o_ref,
                     act_ref, col_ref, wbuf, dma_sem,
                     *, H, W, roll_matches_jnp):
    """
    x_ref   : (C, M)    f32  VMEM   input (channels on sublanes, pixels on lanes)
    w_hbm   : (L, C, 9C) bf16 HBM   packed taps per layer (BN scale folded in)
    b_ref   : (L, C, 1) f32  VMEM   folded bias per layer
    o_ref   : (C, M)    f32  VMEM   output
    act_ref : (C, M)    bf16 VMEM   activation carried across layers
    col_ref : (9C, M)   bf16 VMEM   im2col tile (one big-K matmul per layer)
    wbuf    : (2, C, 9C) bf16 VMEM  double-buffered weight tiles
    dma_sem : (2,) DMA semaphores
    """
    n_layers = w_hbm.shape[0]
    Cc, M = o_ref.shape

    def start_fetch(layer, slot):
        pltpu.make_async_copy(w_hbm.at[layer], wbuf.at[slot],
                              dma_sem.at[slot]).start()

    # Prime layer 0's weights, then seed the VMEM-resident activation.
    start_fetch(0, 0)
    act_ref[...] = x_ref[...].astype(act_ref.dtype)

    # Layer-invariant boundary masks / offsets for the 9 taps (computed once).
    m_iota = lax.broadcasted_iota(jnp.int32, (1, M), 1)
    y_idx = (m_iota % (H * W)) // W
    x_idx = m_iota % W
    tap_off, tap_mask = [], []
    for k in range(9):
        ky, kx = k // 3 - 1, k % 3 - 1
        yy, xx = y_idx + ky, x_idx + kx
        valid = (yy >= 0) & (yy < H) & (xx >= 0) & (xx < W)
        tap_off.append(ky * W + kx)
        tap_mask.append(valid.astype(jnp.float32))

    @pl.loop(0, n_layers)
    def _layer(l):
        slot = l % 2
        # Wait for this layer's taps; immediately prefetch the next layer's.
        pltpu.make_async_copy(w_hbm.at[0], wbuf.at[slot],
                              dma_sem.at[slot]).wait()

        @pl.when(l + 1 < n_layers)
        def _prefetch():
            start_fetch(l + 1, 1 - slot)

        # Build the (9C, M) im2col tile: lane rotations + boundary masks.
        # Rolls/masks run on a 32-bit copy (well-supported XLU/VPU paths);
        # all of it hides under the ~K/256-cycle MXU matmul.
        act32 = act_ref[...].astype(jnp.float32)             # one upcast per layer
        for k in range(9):
            if k == 4:                                       # center tap: identity
                col_ref[k * Cc:(k + 1) * Cc, :] = act_ref[...]
            else:
                shifted = _roll_plus(act32, tap_off[k], roll_matches_jnp)
                col_ref[k * Cc:(k + 1) * Cc, :] = (
                    shifted * tap_mask[k]).astype(jnp.bfloat16)

        # One big-K MXU matmul per layer: (C, 9C) x (9C, M) -> (C, M), f32 acc.
        acc = jnp.dot(wbuf[slot], col_ref[...],
                      preferred_element_type=jnp.float32)
        y = jnp.maximum(acc + b_ref[l], 0.0)                 # folded bias + ReLU
        act_ref[...] = y.astype(act_ref.dtype)

    o_ref[...] = act_ref[...].astype(o_ref.dtype)


# ---------------------------------------------------------------------------
# Wrapper
# ---------------------------------------------------------------------------
def _mid_forward_impl(x_nchw, w_packed, b_packed, *, roll_matches_jnp):
    """x_nchw: (N, C, H, W) f32; w_packed: (L, C, 9C) bf16; b_packed: (L, C, 1) f32."""
    N, Cc, H, W = x_nchw.shape
    L = w_packed.shape[0]
    M = N * H * W

    # NCHW -> (C, N*H*W): channels on sublanes, flattened pixels on lanes.
    x_cm = jnp.transpose(x_nchw, (1, 0, 2, 3)).reshape(Cc, M)

    kernel = functools.partial(mid_fused_kernel, H=H, W=W,
                               roll_matches_jnp=roll_matches_jnp)

    flops = 2 * L * Cc * (9 * Cc) * M
    bytes_accessed = (w_packed.size * 2 + b_packed.size * 4
                      + x_cm.size * 4 + Cc * M * 4)

    y_cm = pl.pallas_call(
        kernel,
        out_shape=jax.ShapeDtypeStruct((Cc, M), jnp.float32),
        in_specs=[
            pl.BlockSpec(memory_space=pltpu.MemorySpace.VMEM),   # input
            pl.BlockSpec(memory_space=pl.ANY),                   # weights stay in HBM
            pl.BlockSpec(memory_space=pltpu.MemorySpace.VMEM),   # bias
        ],
        out_specs=pl.BlockSpec(memory_space=pltpu.MemorySpace.VMEM),
        scratch_shapes=[
            pltpu.VMEM((Cc, M), jnp.bfloat16),            # activation carry
            pltpu.VMEM((9 * Cc, M), jnp.bfloat16),        # im2col tile
            pltpu.VMEM((2, Cc, 9 * Cc), jnp.bfloat16),    # weight double buffer
            pltpu.SemaphoreType.DMA((2,)),
        ],
        cost_estimate=pl.CostEstimate(
            flops=flops, transcendentals=0, bytes_accessed=bytes_accessed),
    )(x_cm, w_packed, b_packed)

    return jnp.transpose(y_cm.reshape(Cc, N, H, W), (1, 0, 2, 3))


# ---------------------------------------------------------------------------
# Parameters (Conv + eval-mode BN folded; weights quantized once to bf16).
# ---------------------------------------------------------------------------
def make_layer_params(key, c_in, c_out):
    kw, kb = jax.random.split(key)
    w = jax.random.normal(kw, (c_out, c_in, 3, 3), jnp.float32) * jnp.sqrt(
        2.0 / (9.0 * c_in))                                   # He-style init
    conv_b = jax.random.normal(kb, (c_out,), jnp.float32) * 0.01
    # BatchNorm eval-mode params (PyTorch defaults).
    gamma = jnp.ones((c_out,), jnp.float32)
    beta = jnp.zeros((c_out,), jnp.float32)
    running_mean = jnp.zeros((c_out,), jnp.float32)
    running_var = jnp.ones((c_out,), jnp.float32)

    bn_scale = gamma / jnp.sqrt(running_var + BN_EPS)
    w_folded = w * bn_scale[:, None, None, None]
    eff_bias = beta + bn_scale * (conv_b - running_mean)
    return w_folded.astype(jnp.bfloat16), eff_bias            # (Cout,Cin,3,3) bf16, (Cout,) f32


def build_mid_params(seed=0):
    keys = jax.random.split(jax.random.PRNGKey(seed), N_LAYERS)
    layers = [make_layer_params(k, C, C) for k in keys]
    w_oihw = jnp.stack([w for w, _ in layers])                 # (L, C, C, 3, 3) bf16
    b = jnp.stack([b for _, b in layers])                      # (L, C) f32
    # Kernel packing: w_packed[l, cout, (i*3+j)*C + cin] = w_oihw[l, cout, cin, i, j]
    w_packed = jnp.transpose(w_oihw, (0, 1, 3, 4, 2)).reshape(N_LAYERS, C, 9 * C)
    b_packed = b.reshape(N_LAYERS, C, 1)
    return w_oihw, w_packed, b_packed


# ---------------------------------------------------------------------------
# Pure-JAX reference (lax.conv), with matching bf16 weight/activation
# quantization so the comparison tolerance can stay tight.
# ---------------------------------------------------------------------------
@jax.jit
def reference_forward(x_nchw, w_oihw_bf16, b_packed):
    act = x_nchw.astype(jnp.bfloat16).astype(jnp.float32)
    for l in range(w_oihw_bf16.shape[0]):
        y = lax.conv_general_dilated(
            act, w_oihw_bf16[l].astype(jnp.float32),
            window_strides=(1, 1), padding=((1, 1), (1, 1)),
            dimension_numbers=("NCHW", "OIHW", "NCHW"),
            precision=lax.Precision.HIGHEST)
        y = jnp.maximum(y + b_packed[l].reshape(1, -1, 1, 1), 0.0)
        act = y.astype(jnp.bfloat16).astype(jnp.float32)
    return act


if __name__ == "__main__":
    roll_matches_jnp = _calibrate_roll_matches_jnp()

    # Small shapes consistent with the module: batch=2, C=128 (fixed), 8x8 spatial.
    key = jax.random.PRNGKey(0)
    x = jax.random.normal(key, (2, C, 8, 8), jnp.float32)

    w_oihw, w_packed, b_packed = build_mid_params(seed=0)

    mid_forward = jax.jit(functools.partial(_mid_forward_impl,
                                            roll_matches_jnp=roll_matches_jnp))

    out = jax.block_until_ready(mid_forward(x, w_packed, b_packed))

    assert out.shape == (2, C, 8, 8), out.shape
    assert out.dtype == jnp.float32
    assert bool(jnp.all(jnp.isfinite(out)))
    assert bool(jnp.all(out >= 0.0))       # final ReLU

    # Numerical cross-check against the lax.conv reference (same bf16
    # quantization points -> only accumulation-order differences remain).
    ref = jax.block_until_ready(reference_forward(x, w_oihw, b_packed))
    max_err = float(jnp.max(jnp.abs(out - ref)))
    scale = float(jnp.max(jnp.abs(ref)))
    assert max_err <= 0.1 * scale + 0.1, (max_err, scale)

    print("KERNEL_OK")
</pallas_src>

<mosaic_0001>
module attributes {stable_mosaic.version = 11 : i64} {
  func.func @_roll_probe_kernel(%arg0: memref<8x128xf32, #tpu.memory_space<vmem>>, %arg1: memref<8x128xf32, #tpu.memory_space<vmem>>) attributes {dimension_semantics = [], scalar_prefetch = 0 : i64, scratch_operands = 0 : i64, tpu.core_type = #tpu.core_type<tc>} {
    %c0 = arith.constant 0 : index
    %c0_0 = arith.constant 0 : index
    %0 = vector.load %arg0[%c0, %c0_0] : memref<8x128xf32, #tpu.memory_space<vmem>>, vector<8x128xf32>
    %c1_i32 = arith.constant 1 : i32
    %1 = tpu.dynamic_rotate %0 by %c1_i32 dim 1 : vector<8x128xf32>, i32 -> vector<8x128xf32>
    %c0_1 = arith.constant 0 : index
    %c0_2 = arith.constant 0 : index
    %2 = vector.load %arg1[%c0_1, %c0_2] : memref<8x128xf32, #tpu.memory_space<vmem>>, vector<8x128xf32>
    tpu.vector_store %arg1[%c0_1, %c0_2], %1 {strides = array<i32>} : memref<8x128xf32, #tpu.memory_space<vmem>>, vector<8x128xf32>,
    return
  }
}

</mosaic_0001>

<llo_original>
// kernel: tpu_custom_call.1
$region0: #{tpu_custom_call.1}
  #allocation0 [shape = 'u32[]', space=smem, size = 0x4, offset = 0x4, fixed_abs, tag = 'smem constant byte address 0x4 - core index']
  #allocation1 [shape = 'u32[144,128]{1,0:T(1,128)}', space=vmem, size = 0x12000, scoped, tag = 'internal scratch']
  %s0 = inlined_call_operand.hbm [shape: f32[8,128], index: 0, kind: input, shape index: {}]
  %s1 = inlined_call_operand.hbm [shape: f32[8,128], index: 1, kind: output, shape index: {}]
  %s2 = sld [smem:[#allocation0]]
  $region18: #{tpu_custom_call.1} parent=0
    _
  %s4 = ssub.s32 1, %s2
  %s5 = scalar_select 0, %s4, %s2
  $region1: #{tpu_custom_call.1} parent=0
    #allocation2 [shape = 'u8[4096]{0}', space=vmem, size = 0x1000, scoped, tag = 'input window, operand 0, single buffered']
    #allocation3 [shape = 's32[1]{0}', space=sflag, size = 0x4, scoped, tag = 'scoped memory for tpu_custom_call.1']
    #allocation4 [shape = 's32[1]{0}', space=sflag, size = 0x4, scoped, tag = 'scoped memory for tpu_custom_call.1']
    #allocation5 [shape = 'u8[4096]{0}', space=vmem, size = 0x1000, scoped, tag = 'output window, operand 0, single buffered']
    %6 = vsyncpa [#allocation3], 0
    %7 = vsyncpa [#allocation4], 0
    // Predicated region
    $region2: #{tpu_custom_call.1} parent=1 // pred_check
      _
    $region3: #{tpu_custom_call.1} parent=1 // pred_check_branch
      %9 = sbr.rel (0) target = $region5
    $region4: #{tpu_custom_call.1} parent=1 // pred_region
      %s11 = ssub.s32 128, 128
      %12 = vsyncadd [#allocation3], %s11
      %s14 = sshll.u32 [#allocation2], 4
      %s15 = int_to_ptr.vmem [resolvable:$true] %s14
      %17 = dma.hbm_to_vmem [thread:$0]  %s0, 128, %s15, [#allocation3]
    $region5: #{tpu_custom_call.1} parent=1 // pred_fallthru
      _
    // Predicated region
    $region6: #{tpu_custom_call.1} parent=1 // pred_check
      _
    $region7: #{tpu_custom_call.1} parent=1 // pred_check_branch
      %19 = sbr.rel (0) target = $region9
    $region8: #{tpu_custom_call.1} parent=1 // pred_region
      %20 = dma.done [#allocation3], 128
    $region9: #{tpu_custom_call.1} parent=1 // pred_fallthru
      _
    %v21 = vld [vmem:[#allocation2] sm:$0xff]
    %22 = vrot.lane.b32.xlu0 %v21, 1
    %v23 = vpop.permute.xlu0 %22
    %24 = vst [vmem:[#allocation5] sm:$0xff] %v23
    // Predicated region
    $region10: #{tpu_custom_call.1} parent=1 // pred_check
      _
    $region11: #{tpu_custom_call.1} parent=1 // pred_check_branch
      %26 = sbr.rel (0) target = $region13
    $region12: #{tpu_custom_call.1} parent=1 // pred_region
      %s28 = ssub.s32 128, 128
      %29 = vsyncadd [#allocation4], %s28
      %s31 = sshll.u32 [#allocation5], 4
      %s32 = int_to_ptr.vmem [resolvable:$true] %s31
      %34 = dma.vmem_to_hbm [thread:$0]  %s32, 128, %s1, [#allocation4]
    $region13: #{tpu_custom_call.1} parent=1 // pred_fallthru
      _
    // Predicated region
    $region14: #{tpu_custom_call.1} parent=1 // pred_check
      _
    $region15: #{tpu_custom_call.1} parent=1 // pred_check_branch
      %36 = sbr.rel (0) target = $region17
    $region16: #{tpu_custom_call.1} parent=1 // pred_region
      %37 = dma.done [#allocation4], 128
    $region17: #{tpu_custom_call.1} parent=1 // pred_fallthru
      _
    %38 = vsyncpa [#allocation3], 1
    %39 = vsyncpa [#allocation4], 1

</llo_original>
